<compile_context>
chip_gen: v6e
topology: v6e:2x2x1
jax: 0.10.0
libtpu: 0.0.40
codegen_flags: <defaults>
</compile_context>

<pallas_src>
import jax
import jax.numpy as jnp
from jax.experimental import pallas as pl
from jax.experimental.pallas import tpu as pltpu

_ELEMS_PER_ROW = 64      # batch elements packed per 256-lane input row
_MAX_TILE_ROWS = 4096    # 4 MiB in + 2 MiB out per step; 12 MiB double-buffered


def _fused_matmul_kernel(w_ref, b_ref, x_ref, o_ref):
    """o = x @ W_big + b_big on one packed batch tile (batch is dense on lanes).

    w_ref: VMEM (256, 128) block-diagonal fused weight (64 copies of the 4x2
           fused affine map).  Constant block index -> stays resident in VMEM.
    b_ref: VMEM (1, 128)    fused bias tiled 64x.      Resident as well.
    x_ref: VMEM (tile_rows, 256)  64 batch elems per row, lane-dense input.
    o_ref: VMEM (tile_rows, 128)  64 batch elems per row, lane-dense output.
    """
    o_ref[...] = jnp.dot(x_ref[...], w_ref[...],
                         preferred_element_type=jnp.float32) + b_ref[...]


def _choose_tile_rows(n_rows):
    """Tile rows: multiple of 8, capped, and >= 2 grid steps when possible."""
    if n_rows <= 8:
        return n_rows                      # single full-extent block
    half = -(-n_rows // 2)                 # ceil(n_rows / 2) -> >= 2 grid steps
    return min(_MAX_TILE_ROWS, ((half + 7) // 8) * 8)


def net_forward(x, params):
    """x: (B, 4) float32 -> (B, 2) float32.  Semantics match PyTorch Net.forward."""
    B = x.shape[0]

    # --- Exact affine fusion of the 3 layers (no activation in Net.forward) ---
    w0, b0 = params["weight"], params["bias"]         # (5, 4), (5,)
    w1, b1 = params["f1_w"], params["f1_b"]           # (16, 5), (16,)
    w2, b2 = params["f2_w"], params["f2_b"]           # (2, 16), (2,)
    w_fused = (w0.T @ w1.T @ w2.T).astype(jnp.float32)            # (4, 2)
    b_fused = ((b0 @ w1.T + b1) @ w2.T + b2).astype(jnp.float32)  # (2,)

    # Block-diagonal (256, 128): 64 independent copies of the 4x2 fused map,
    # one per batch element packed into a 256-lane input row.
    eye = jnp.eye(_ELEMS_PER_ROW, dtype=jnp.float32)
    w_big = jnp.einsum("ij,kl->ikjl", eye, w_fused).reshape(
        4 * _ELEMS_PER_ROW, 2 * _ELEMS_PER_ROW)                   # (256, 128)
    b_row = jnp.tile(b_fused, _ELEMS_PER_ROW).reshape(
        1, 2 * _ELEMS_PER_ROW)                                    # (1, 128)

    # --- Batch packing: contiguous (B,4) -> (R, 256); free row-major reshape ---
    n_rows = -(-B // _ELEMS_PER_ROW)
    tile_rows = _choose_tile_rows(n_rows)
    grid_steps = -(-n_rows // tile_rows)
    n_rows_pad = grid_steps * tile_rows
    b_pad = n_rows_pad * _ELEMS_PER_ROW

    xf = jnp.asarray(x, jnp.float32)
    if b_pad != B:
        xf = jnp.pad(xf, ((0, b_pad - B), (0, 0)))
    x_packed = xf.reshape(n_rows_pad, 4 * _ELEMS_PER_ROW)         # (R_pad, 256)

    cost = pl.CostEstimate(
        flops=2 * n_rows_pad * (4 * _ELEMS_PER_ROW) * (2 * _ELEMS_PER_ROW),
        transcendentals=0,
        bytes_accessed=(n_rows_pad * (4 + 2) * _ELEMS_PER_ROW * 4
                        + w_big.size * 4 + b_row.size * 4),
    )

    out_packed = pl.pallas_call(
        _fused_matmul_kernel,
        out_shape=jax.ShapeDtypeStruct((n_rows_pad, 2 * _ELEMS_PER_ROW),
                                       jnp.float32),
        grid=(grid_steps,),
        in_specs=[
            pl.BlockSpec((4 * _ELEMS_PER_ROW, 2 * _ELEMS_PER_ROW),
                         lambda i: (0, 0)),                       # fused weight
            pl.BlockSpec((1, 2 * _ELEMS_PER_ROW), lambda i: (0, 0)),  # fused bias
            pl.BlockSpec((tile_rows, 4 * _ELEMS_PER_ROW),
                         lambda i: (i, 0)),                       # packed x tile
        ],
        out_specs=pl.BlockSpec((tile_rows, 2 * _ELEMS_PER_ROW),
                               lambda i: (i, 0)),                 # packed out tile
        compiler_params=pltpu.CompilerParams(
            dimension_semantics=("parallel",),
            vmem_limit_bytes=32 * 1024 * 1024),
        cost_estimate=cost,
    )(w_big, b_row, x_packed)

    # Free row-major reshape back to (B_pad, 2), then drop the padded rows.
    return out_packed.reshape(b_pad, 2)[:B]


def init_params(key):
    """Deterministic parameter init matching the module's shapes.

    Net.__init__:
      weight: (5, 4), bias: zeros(5)   (the frozen F.linear params)
      f1: Linear(5, 16)  -> W (16, 5), b (16,)
      f2: Linear(16, 2)  -> W (2, 16), b (2,)
    """
    k0, k1, k2, k3, k4 = jax.random.split(key, 5)
    return {
        "weight": jax.random.normal(k0, (5, 4), jnp.float32) * 0.1,
        "bias": jnp.zeros((5,), jnp.float32),
        "f1_w": jax.random.normal(k1, (16, 5), jnp.float32) * 0.1,
        "f1_b": jax.random.normal(k2, (16,), jnp.float32) * 0.01,
        "f2_w": jax.random.normal(k3, (2, 16), jnp.float32) * 0.1,
        "f2_b": jax.random.normal(k4, (2,), jnp.float32) * 0.01,
    }


def _reference_forward(x, params):
    """Plain-JAX reference of the (unfused) PyTorch forward, for correctness."""
    h0 = x @ params["weight"].T + params["bias"]
    h1 = h0 @ params["f1_w"].T + params["f1_b"]
    return h1 @ params["f2_w"].T + params["f2_b"]


if __name__ == "__main__":
    key = jax.random.PRNGKey(0)
    kx, kp = jax.random.split(key)

    B = 2  # small batch consistent with the module (in_features = 4)
    x = jax.random.normal(kx, (B, 4), jnp.float32)
    params = init_params(kp)

    out = net_forward(x, params)
    out = jax.block_until_ready(out)

    ref = _reference_forward(x, params)
    assert out.shape == (B, 2)
    assert jnp.allclose(out, ref, atol=1e-5, rtol=1e-5)

    print("KERNEL_OK")
</pallas_src>

<mosaic_0001>
module attributes {stable_mosaic.version = 11 : i64} {
  func.func @_fused_matmul_kernel(%arg0: i32, %arg1: memref<256x128xf32, #tpu.memory_space<vmem>>, %arg2: memref<1x128xf32, #tpu.memory_space<vmem>>, %arg3: memref<1x256xf32, #tpu.memory_space<vmem>>, %arg4: memref<1x128xf32, #tpu.memory_space<vmem>>) attributes {dimension_semantics = [#tpu.dimension_semantics<parallel>], iteration_bounds = array<i64: 1>, scalar_prefetch = 0 : i64, scratch_operands = 0 : i64, tpu.core_type = #tpu.core_type<tc>, window_params = [{pipeline_mode = #tpu.pipeline_mode<synchronous>, transform_indices = @transform_0, window_bounds = array<i64: 256, 128>}, {pipeline_mode = #tpu.pipeline_mode<synchronous>, transform_indices = @transform_1, window_bounds = array<i64: 1, 128>}, {transform_indices = @transform_2, window_bounds = array<i64: 1, 256>}, {transform_indices = @transform_3, window_bounds = array<i64: 1, 128>}]} {
    %c0 = arith.constant 0 : index
    %c0_0 = arith.constant 0 : index
    %0 = vector.load %arg3[%c0, %c0_0] : memref<1x256xf32, #tpu.memory_space<vmem>>, vector<1x256xf32>
    %c0_1 = arith.constant 0 : index
    %c0_2 = arith.constant 0 : index
    %1 = vector.load %arg1[%c0_1, %c0_2] : memref<256x128xf32, #tpu.memory_space<vmem>>, vector<256x128xf32>
    %cst = arith.constant dense<0.000000e+00> : vector<1x128xf32>
    %2 = tpu.matmul %0, %1, %cst {dimension_numbers = #tpu.dot_dimension_numbers<[1], [0], [0], [1], [0, 0, 1, 1], [], []>} : vector<1x256xf32>, vector<256x128xf32>, vector<1x128xf32> -> vector<1x128xf32>
    %c0_3 = arith.constant 0 : index
    %c0_4 = arith.constant 0 : index
    %3 = vector.load %arg2[%c0_3, %c0_4] : memref<1x128xf32, #tpu.memory_space<vmem>>, vector<1x128xf32>
    %4 = arith.addf %2, %3 : vector<1x128xf32>
    %c0_5 = arith.constant 0 : index
    %c0_6 = arith.constant 0 : index
    %5 = vector.load %arg4[%c0_5, %c0_6] : memref<1x128xf32, #tpu.memory_space<vmem>>, vector<1x128xf32>
    tpu.vector_store %arg4[%c0_5, %c0_6], %4 {strides = array<i32>} : memref<1x128xf32, #tpu.memory_space<vmem>>, vector<1x128xf32>,
    return
  }
  func.func @transform_0(%arg0: i32) -> (i32, i32) {
    %c0_i32 = arith.constant 0 : i32
    %c0_i32_0 = arith.constant 0 : i32
    %c0_i32_1 = arith.constant 0 : i32
    return %c0_i32, %c0_i32_0 : i32, i32
  }
  func.func @transform_1(%arg0: i32) -> (i32, i32) {
    %c0_i32 = arith.constant 0 : i32
    %c0_i32_0 = arith.constant 0 : i32
    %c0_i32_1 = arith.constant 0 : i32
    return %c0_i32, %c0_i32_0 : i32, i32
  }
  func.func @transform_2(%arg0: i32) -> (i32, i32) {
    %c0_i32 = arith.constant 0 : i32
    %c0_i32_0 = arith.constant 0 : i32
    return %arg0, %c0_i32 : i32, i32
  }
  func.func @transform_3(%arg0: i32) -> (i32, i32) {
    %c0_i32 = arith.constant 0 : i32
    %c0_i32_0 = arith.constant 0 : i32
    return %arg0, %c0_i32 : i32, i32
  }
}

</mosaic_0001>

<llo_original>
// kernel: tpu_custom_call.1
$region0: #{tpu_custom_call.1}
  #allocation0 [shape = 'u32[]', space=smem, size = 0x4, offset = 0x4, fixed_abs, tag = 'smem constant byte address 0x4 - core index']
  #allocation1 [shape = 'u32[144,128]{1,0:T(1,128)}', space=vmem, size = 0x12000, scoped, tag = 'internal scratch']
  %s0 = inlined_call_operand.hbm [shape: f32[256,128], index: 0, kind: input, shape index: {}]
  %s1 = inlined_call_operand.vmem [shape: f32[1,128], index: 1, kind: input, shape index: {}]
  %s2 = inlined_call_operand.vmem [shape: f32[1,256], index: 2, kind: input, shape index: {}]
  %s3 = inlined_call_operand.hbm [shape: f32[1,128], index: 3, kind: output, shape index: {}]
  %s4 = sld [smem:[#allocation0]]
  $region26: #{tpu_custom_call.1} parent=0
    _
  %s6 = ssub.s32 1, %s4
  %s7 = scalar_select 0, %s6, %s4
  $region1: #{tpu_custom_call.1} parent=0
    #allocation2 [shape = 'u8[131072]{0}', space=vmem, size = 0x20000, scoped, tag = 'input window, operand 0, single buffered']
    #allocation3 [shape = 's32[1]{0}', space=sflag, size = 0x4, scoped, tag = 'scoped memory for tpu_custom_call.1']
    #allocation4 [shape = 's32[1]{0}', space=sflag, size = 0x4, scoped, tag = 'scoped memory for tpu_custom_call.1']
    #allocation5 [shape = 'u8[512]{0}', space=vmem, size = 0x400, scoped, tag = 'output window, operand 0, single buffered']
    %8 = vsyncpa [#allocation3], 0
    %9 = vsyncpa [#allocation4], 0
    // Predicated region
    $region2: #{tpu_custom_call.1} parent=1 // pred_check
      _
    $region3: #{tpu_custom_call.1} parent=1 // pred_check_branch
      %11 = sbr.rel (0) target = $region5
    $region4: #{tpu_custom_call.1} parent=1 // pred_region
      %s13 = ssub.s32 4096, 4096
      %14 = vsyncadd [#allocation3], %s13
      %s15 = sshll.u32 [#allocation2], 4
      %s16 = int_to_ptr.vmem [resolvable:$true] %s15
      %21 = dma.hbm_to_vmem [thread:$0]  %s0, 4096, %s16, [#allocation3], 128, 128, 8
    $region5: #{tpu_custom_call.1} parent=1 // pred_fallthru
      _
    // Predicated region
    $region6: #{tpu_custom_call.1} parent=1 // pred_check
      _
    $region7: #{tpu_custom_call.1} parent=1 // pred_check_branch
      %23 = sbr.rel (0) target = $region9
    $region8: #{tpu_custom_call.1} parent=1 // pred_region
      _
    $region9: #{tpu_custom_call.1} parent=1 // pred_fallthru
      _
    // Predicated region
    $region10: #{tpu_custom_call.1} parent=1 // pred_check
      _
    $region11: #{tpu_custom_call.1} parent=1 // pred_check_branch
      %25 = sbr.rel (0) target = $region13
    $region12: #{tpu_custom_call.1} parent=1 // pred_region
      _
    $region13: #{tpu_custom_call.1} parent=1 // pred_fallthru
      _
    // Predicated region
    $region14: #{tpu_custom_call.1} parent=1 // pred_check
      _
    $region15: #{tpu_custom_call.1} parent=1 // pred_check_branch
      %27 = sbr.rel (0) target = $region17
    $region16: #{tpu_custom_call.1} parent=1 // pred_region
      %28 = dma.done [#allocation3], 4096
    $region17: #{tpu_custom_call.1} parent=1 // pred_fallthru
      _
    %v29 = vld [vmem:[%s2] sm:$0x3]
    %v30 = vld [vmem:[#allocation2] sm:$0xff]
    %v31 = vld [vmem:[#allocation2 + $0x8] sm:$0xff]
    %v32 = vld [vmem:[#allocation2 + $0x10] sm:$0xff]
    %v33 = vld [vmem:[#allocation2 + $0x18] sm:$0xff]
    %v34 = vld [vmem:[#allocation2 + $0x20] sm:$0xff]
    %v35 = vld [vmem:[#allocation2 + $0x28] sm:$0xff]
    %v36 = vld [vmem:[#allocation2 + $0x30] sm:$0xff]
    %v37 = vld [vmem:[#allocation2 + $0x38] sm:$0xff]
    %v38 = vld [vmem:[#allocation2 + $0x40] sm:$0xff]
    %v39 = vld [vmem:[#allocation2 + $0x48] sm:$0xff]
    %v40 = vld [vmem:[#allocation2 + $0x50] sm:$0xff]
    %v41 = vld [vmem:[#allocation2 + $0x58] sm:$0xff]
    %v42 = vld [vmem:[#allocation2 + $0x60] sm:$0xff]
    %v43 = vld [vmem:[#allocation2 + $0x68] sm:$0xff]
    %v44 = vld [vmem:[#allocation2 + $0x70] sm:$0xff]
    %v45 = vld [vmem:[#allocation2 + $0x78] sm:$0xff]
    %v46 = vld [vmem:[#allocation2 + $0x80] sm:$0xff]
    %v47 = vld [vmem:[#allocation2 + $0x88] sm:$0xff]
    %v48 = vld [vmem:[#allocation2 + $0x90] sm:$0xff]
    %v49 = vld [vmem:[#allocation2 + $0x98] sm:$0xff]
    %v50 = vld [vmem:[#allocation2 + $0xa0] sm:$0xff]
    %v51 = vld [vmem:[#allocation2 + $0xa8] sm:$0xff]
    %v52 = vld [vmem:[#allocation2 + $0xb0] sm:$0xff]
    %v53 = vld [vmem:[#allocation2 + $0xb8] sm:$0xff]
    %v54 = vld [vmem:[#allocation2 + $0xc0] sm:$0xff]
    %v55 = vld [vmem:[#allocation2 + $0xc8] sm:$0xff]
    %v56 = vld [vmem:[#allocation2 + $0xd0] sm:$0xff]
    %v57 = vld [vmem:[#allocation2 + $0xd8] sm:$0xff]
    %v58 = vld [vmem:[#allocation2 + $0xe0] sm:$0xff]
    %v59 = vld [vmem:[#allocation2 + $0xe8] sm:$0xff]
    %v60 = vld [vmem:[#allocation2 + $0xf0] sm:$0xff]
    %v61 = vld [vmem:[#allocation2 + $0xf8] sm:$0xff]
    %v62 = vld [vmem:[%s1] sm:$0x1]
    %v64 = vlaneseq
    %v65 = vshrl.u32 %v64, 7
    %v66 = vsub.s32 0, %v65
    %v67 = vrot.slane %v29, %v66
    %v68 = vlaneseq
    %v69 = vshrl.u32 %v68, 7
    %v70 = vsub.s32 1, %v69
    %v71 = vrot.slane %v29, %v70
    %74 = vmatprep.subr.mxu0 0.0
    %75 = vmatpush1.msra.mxu0 %v45
    %76 = vmatprep.subr.mxu0 0.0
    %77 = vmatpush1.msra.mxu0 %v44
    %78 = vmatprep.subr.mxu0 0.0
    %79 = vmatpush1.msra.mxu0 %v43
    %80 = vmatprep.subr.mxu0 0.0
    %81 = vmatpush1.msra.mxu0 %v42
    %82 = vmatprep.subr.mxu0 0.0
    %83 = vmatpush1.msra.mxu0 %v41
    %84 = vmatprep.subr.mxu0 0.0
    %85 = vmatpush1.msra.mxu0 %v40
    %86 = vmatprep.subr.mxu0 0.0
    %87 = vmatpush1.msra.mxu0 %v39
    %88 = vmatprep.subr.mxu0 0.0
    %89 = vmatpush1.msra.mxu0 %v38
    %90 = vmatprep.subr.mxu0 0.0
    %91 = vmatpush1.msra.mxu0 %v37
    %92 = vmatprep.subr.mxu0 0.0
    %93 = vmatpush1.msra.mxu0 %v36
    %94 = vmatprep.subr.mxu0 0.0
    %95 = vmatpush1.msra.mxu0 %v35
    %96 = vmatprep.subr.mxu0 0.0
    %97 = vmatpush1.msra.mxu0 %v34
    %98 = vmatprep.subr.mxu0 0.0
    %99 = vmatpush1.msra.mxu0 %v33
    %100 = vmatprep.subr.mxu0 0.0
    %101 = vmatpush1.msra.mxu0 %v32
    %102 = vmatprep.subr.mxu0 0.0
    %103 = vmatpush1.msra.mxu0 %v31
    %104 = vmatprep.subr.mxu0 0.0
    %105 = vmatpush1.msra.mxu0 %v30
    %106 = vmatprep.subr.mxu0 0.0
    %107 = vmatpush2.msra.mxu0 %v61
    %108 = vmatprep.subr.mxu0 0.0
    %109 = vmatpush2.msra.mxu0 %v60
    %110 = vmatprep.subr.mxu0 0.0
    %111 = vmatpush2.msra.mxu0 %v59
    %112 = vmatprep.subr.mxu0 0.0
    %113 = vmatpush2.msra.mxu0 %v58
    %114 = vmatprep.subr.mxu0 0.0
    %115 = vmatpush2.msra.mxu0 %v57
    %116 = vmatprep.subr.mxu0 0.0
    %117 = vmatpush2.msra.mxu0 %v56
    %118 = vmatprep.subr.mxu0 0.0
    %119 = vmatpush2.msra.mxu0 %v55
    %120 = vmatprep.subr.mxu0 0.0
    %121 = vmatpush2.msra.mxu0 %v54
    %122 = vmatprep.subr.mxu0 0.0
    %123 = vmatpush2.msra.mxu0 %v53
    %124 = vmatprep.subr.mxu0 0.0
    %125 = vmatpush2.msra.mxu0 %v52
    %126 = vmatprep.subr.mxu0 0.0
    %127 = vmatpush2.msra.mxu0 %v51
    %128 = vmatprep.subr.mxu0 0.0
    %129 = vmatpush2.msra.mxu0 %v50
    %130 = vmatprep.subr.mxu0 0.0
    %131 = vmatpush2.msra.mxu0 %v49
    %132 = vmatprep.subr.mxu0 0.0
    %133 = vmatpush2.msra.mxu0 %v48
    %134 = vmatprep.subr.mxu0 0.0
    %135 = vmatpush2.msra.mxu0 %v47
    %136 = vmatprep.subr.mxu0 0.0
    %137 = vmatpush2.msra.mxu0 %v46
    %138 = vmatprep.mubr.f32.mxu0 %v71
    %139 = vmatmul.mubr.f32.gmra.mxu0 %v67
    %v140 = vpop.f32.mrf.mxu0
    %v141 = vadd.f32 %v62, %v140
    %v142 = vpop.f32.mrf.mxu0
    %143 = vdwg.mxu0
    %144 = vst [vmem:[#allocation5] sm:$0x1] %v141
    // Predicated region
    $region18: #{tpu_custom_call.1} parent=1 // pred_check
      _
    $region19: #{tpu_custom_call.1} parent=1 // pred_check_branch
      %146 = sbr.rel (0) target = $region21
    $region20: #{tpu_custom_call.1} parent=1 // pred_region
      %s148 = ssub.s32 16, 16
      %149 = vsyncadd [#allocation4], %s148
      %s151 = sshll.u32 [#allocation5], 4
      %s152 = int_to_ptr.vmem [resolvable:$true] %s151
      %154 = dma.vmem_to_hbm [thread:$0]  %s152, 16, %s3, [#allocation4]
    $region21: #{tpu_custom_call.1} parent=1 // pred_fallthru
      _
    // Predicated region
    $region22: #{tpu_custom_call.1} parent=1 // pred_check
      _
    $region23: #{tpu_custom_call.1} parent=1 // pred_check_branch
      %156 = sbr.rel (0) target = $region25
    $region24: #{tpu_custom_call.1} parent=1 // pred_region
      %157 = dma.done [#allocation4], 16
    $region25: #{tpu_custom_call.1} parent=1 // pred_fallthru
      _
    %158 = vsyncpa [#allocation3], 1
    %159 = vsyncpa [#allocation4], 1

</llo_original>
